<compile_context>
chip_gen: v5e
topology: v5e:2x2
jax: 0.10.0
libtpu: 0.0.40
codegen_flags: <defaults>
</compile_context>

<pallas_src>
import functools

import numpy as np
import jax
import jax.numpy as jnp
from jax.experimental import pallas as pl
from jax.experimental.pallas import tpu as pltpu


def _round_up(v, m):
    return ((v + m - 1) // m) * m


def _audio_decoder_kernel(lhs_ref, basis_ref, inv_env_ref, out_ref, fr_ref, *, hop):
    n_fft_p = basis_ref.shape[1]        # Np (lane-padded frame length)
    t_p, l_p = fr_ref.shape             # (Tp, Lp)

    # 1) fused ConvTranspose2d + complex + inverse one-sided DFT (+ bias via ones column):
    #    a single MXU matmul for this batch element.
    frames = jnp.dot(lhs_ref[...], basis_ref[...],
                     preferred_element_type=jnp.float32)           # (Tp, Np) f32

    # 2) stage frames into the lane-padded (Tp, Lp) scratch; columns >= Np are kept zero
    #    (they carry no frame data and must not contribute to the overlap-add).
    if l_p > n_fft_p:
        fr_ref[:, n_fft_p:] = jnp.zeros((t_p, l_p - n_fft_p), jnp.float32)
    fr_ref[:, 0:n_fft_p] = frames

    # 3) overlap-add: rotate frame t right by t*hop lanes (one strided XLU roll), reduce
    #    over the frame (sublane) axis, and normalize by the rectangular-window envelope.
    #    Padding rows (t >= T) and padding lanes (n >= n_fft) are exact zeros, so they add
    #    nothing; the result is a lane-dense (1, Lp) row.
    rolled = pltpu.roll(fr_ref[...], shift=0, axis=1, stride=hop, stride_axis=0)
    out_ref[0] = jnp.sum(rolled, axis=0, keepdims=True) * inv_env_ref[...]


def audio_decoder(x, weight, bias, n_fft, hop_length, length, *, mxu_dtype=None):
    """x: (B, C, T, F) f32, weight: (C, 2, 3, 3) ConvTranspose2d weight, bias: (2,).
    Returns (B, length) f32, matching
    torch.istft(complex(ConvTranspose2d(x)).transpose(1,2), n_fft, hop_length, length=length)."""
    B, C, T, F = x.shape
    N = int(n_fft)
    assert F == N // 2 + 1, "frequency dim must be n_fft // 2 + 1"
    hop = int(hop_length) if hop_length is not None else N // 4
    assert 0 < hop <= N
    pad = N // 2                       # center trim of torch.istft (center=True)
    L_full = N + hop * (T - 1)         # total overlap-add length before trimming

    G = F + 2                          # F bins + conv zero-padding of 1 on each side
    K0 = 3 * C * G + 1                 # 3 time taps x C channels x G bins + bias column
    Tp = _round_up(T, 8)
    Kp = _round_up(K0, 128)
    Np = _round_up(N, 128)
    Lp = _round_up(L_full, 128)

    if mxu_dtype is None:
        # bf16 basis/LHS (f32 accumulation) once the matmul is non-trivial; f32 for toy sizes.
        mxu_dtype = jnp.float32 if (K0 * N) < (1 << 18) else jnp.bfloat16

    # ---- one-sided inverse DFT bases (torch.fft.irfft, norm='backward') -----------------
    k = np.arange(F, dtype=np.float64)[:, None]
    n = np.arange(N, dtype=np.float64)[None, :]
    ang = 2.0 * np.pi * k * n / N
    w = np.full((F, 1), 2.0)
    w[0, 0] = 1.0
    if N % 2 == 0:
        w[-1, 0] = 1.0
    cos_np = (w * np.cos(ang)) / N          # (F, N) weights for Re(spec)
    sin_np = (-w * np.sin(ang)) / N         # (F, N) weights for Im(spec)

    # shifted copies for the 3 frequency taps of the 3x3 kernel
    cos_sh = np.zeros((3, G, N))
    sin_sh = np.zeros((3, G, N))
    for df in range(3):
        cos_sh[df, df:df + F, :] = cos_np
        sin_sh[df, df:df + F, :] = sin_np
    cos_sh = jnp.asarray(cos_sh, jnp.float32)
    sin_sh = jnp.asarray(sin_sh, jnp.float32)

    # flipped ConvTranspose2d weight: wf[o, c, dt, df] = weight[c, o, 2-dt, 2-df]
    wf = jnp.transpose(weight.astype(jnp.float32), (1, 0, 2, 3))[:, :, ::-1, ::-1]

    # fused (ConvTranspose2d ∘ irfft) basis + bias row folded in as the last K row
    basis = (jnp.einsum('cde,egn->cdgn', wf[0], cos_sh) +
             jnp.einsum('cde,egn->cdgn', wf[1], sin_sh))              # (C, 3, G, N)
    bias_row = (bias[0].astype(jnp.float32) * jnp.asarray(cos_np.sum(0), jnp.float32) +
                bias[1].astype(jnp.float32) * jnp.asarray(sin_np.sum(0), jnp.float32))
    basis = jnp.concatenate([basis.reshape(3 * C * G, N),
                             bias_row.reshape(1, N)], axis=0)          # (K0, N)
    basis = jnp.pad(basis, ((0, Kp - K0), (0, Np - N))).astype(mxu_dtype)   # (Kp, Np)

    # ---- matmul LHS built with cheap XLA ops (no in-kernel gather) -----------------------
    # lhs[b, t, (c*3 + dt)*G + g] = x_pad[b, c, t + dt, g];  ones column for the bias.
    xp = jnp.pad(x.astype(jnp.float32), ((0, 0), (0, 0), (1, 1), (1, 1)))   # (B, C, T+2, G)
    taps = jnp.stack([xp[:, :, dt:dt + T, :] for dt in range(3)], axis=3)   # (B, C, T, 3, G)
    taps = jnp.transpose(taps, (0, 2, 1, 3, 4)).reshape(B, T, 3 * C * G)
    lhs = jnp.concatenate([taps, jnp.ones((B, T, 1), jnp.float32)], axis=-1)
    lhs = jnp.pad(lhs, ((0, 0), (0, Tp - T), (0, Kp - K0)))                  # zero pad rows/cols
    lhs = lhs.astype(mxu_dtype).reshape(B * Tp, Kp)

    # ---- rectangular-window envelope, lane-dense (1, Lp); padding lanes -> 0 -------------
    env = np.zeros((L_full,), np.float64)
    for t in range(T):
        env[t * hop:t * hop + N] += 1.0
    inv_env = np.zeros((1, Lp), np.float32)
    inv_env[0, :L_full] = 1.0 / env
    inv_env = jnp.asarray(inv_env)

    # ---- pallas_call --------------------------------------------------------------------
    itemsize = np.dtype(mxu_dtype).itemsize
    vmem_bytes = (2 * Tp * Kp * itemsize      # per-step LHS block (double-buffered)
                  + 2 * Kp * Np * itemsize    # basis (resident, counted 2x to be safe)
                  + 2 * Lp * 4                # 1/envelope
                  + 2 * Lp * 4                # output block
                  + Tp * Lp * 4)              # frame scratch
    vmem_limit = int(min(40 * 2 ** 20, max(2 * 2 ** 20, 2 * vmem_bytes)))

    cost = pl.CostEstimate(
        flops=int(2 * B * Tp * Kp * Np + B * Tp * Lp + B * Lp),
        transcendentals=0,
        bytes_accessed=int(itemsize * (lhs.size + basis.size)
                           + 4 * (inv_env.size + B * Lp)))

    kernel = functools.partial(_audio_decoder_kernel, hop=hop)

    out3 = pl.pallas_call(
        kernel,
        out_shape=jax.ShapeDtypeStruct((B, 1, Lp), jnp.float32),
        grid=(B,),
        in_specs=[
            pl.BlockSpec((Tp, Kp), lambda b: (b, 0)),     # per-batch LHS tile
            pl.BlockSpec((Kp, Np), lambda b: (0, 0)),     # fused basis (stays resident)
            pl.BlockSpec((1, Lp), lambda b: (0, 0)),      # 1/envelope  (stays resident)
        ],
        out_specs=pl.BlockSpec((1, 1, Lp), lambda b: (b, 0, 0)),
        scratch_shapes=[pltpu.VMEM((Tp, Lp), jnp.float32)],
        compiler_params=pltpu.CompilerParams(
            dimension_semantics=("parallel",),
            vmem_limit_bytes=vmem_limit),
        cost_estimate=cost,
    )(lhs, basis, inv_env)

    out_full = out3.reshape(B, Lp)[:, :L_full]
    avail = L_full - pad
    if length <= avail:
        return out_full[:, pad:pad + length]
    # torch.istft zero-pads when the requested length exceeds the reconstructable range
    return jnp.pad(out_full[:, pad:], ((0, 0), (0, length - avail)))


def reference(x, weight, bias, n_fft, hop, length):
    """Pure-JAX reference mirroring torch ConvTranspose2d + torch.istft semantics."""
    B, C, T, F = x.shape
    wf = jnp.transpose(weight, (1, 0, 2, 3))[:, :, ::-1, ::-1]
    y = jax.lax.conv_general_dilated(
        x.astype(jnp.float32), wf.astype(jnp.float32),
        window_strides=(1, 1), padding=((1, 1), (1, 1)),
        dimension_numbers=("NCHW", "OIHW", "NCHW"))
    y = y + bias[None, :, None, None]
    spec = y[:, 0] + 1j * y[:, 1]                      # (B, T, F) complex
    spec = jnp.transpose(spec, (0, 2, 1))              # (B, F, T) = istft layout
    frames = jnp.fft.irfft(spec, n=n_fft, axis=1)      # (B, n_fft, T)
    L_full = n_fft + hop * (T - 1)
    out = jnp.zeros((B, L_full), jnp.float32)
    env = jnp.zeros((L_full,), jnp.float32)
    for t in range(T):
        out = out.at[:, t * hop:t * hop + n_fft].add(frames[:, :, t])
        env = env.at[t * hop:t * hop + n_fft].add(1.0)
    out = out / env[None, :]
    pad = n_fft // 2
    return out[:, pad:pad + length]


if __name__ == "__main__":
    # small but consistent shapes: B=2, C=4 audio channels, n_fft=16 -> F=9 bins,
    # hop=4, T=8 frames, target length = (T-1)*hop = 28 samples
    B, C = 2, 4
    n_fft = 16
    hop = 4
    T = 8
    F = n_fft // 2 + 1
    length = (T - 1) * hop
    input_size = (B, length)            # torch.Size analogue; only [-1] is used

    key = jax.random.PRNGKey(0)
    k1, k2, k3 = jax.random.split(key, 3)
    separated_audio = jax.random.normal(k1, (B, C, T, F), jnp.float32)
    conv_weight = 0.1 * jax.random.normal(k2, (C, 2, 3, 3), jnp.float32)  # ConvTranspose2d: (in, out, kH, kW)
    conv_bias = 0.1 * jax.random.normal(k3, (2,), jnp.float32)

    out = audio_decoder(separated_audio, conv_weight, conv_bias,
                        n_fft, hop, input_size[-1])
    out = jax.block_until_ready(out)

    assert out.shape == (B, length)
    assert bool(jnp.all(jnp.isfinite(out)))

    ref = reference(separated_audio, conv_weight, conv_bias, n_fft, hop, input_size[-1])
    if not bool(jnp.allclose(out, ref, atol=2e-3, rtol=2e-3)):
        raise AssertionError(
            f"Pallas output mismatch vs reference, max abs err = "
            f"{float(jnp.max(jnp.abs(out - ref)))}")

    print("KERNEL_OK")
</pallas_src>

<mosaic_0001>
module attributes {stable_mosaic.version = 11 : i64} {
  func.func @_audio_decoder_kernel(%arg0: i32, %arg1: memref<8x256xf32, #tpu.memory_space<vmem>>, %arg2: memref<256x128xf32, #tpu.memory_space<vmem>>, %arg3: memref<1x128xf32, #tpu.memory_space<vmem>>, %arg4: memref<1x1x128xf32, #tpu.memory_space<vmem>>, %arg5: memref<8x128xf32, #tpu.memory_space<vmem>>) attributes {dimension_semantics = [#tpu.dimension_semantics<parallel>], iteration_bounds = array<i64: 2>, scalar_prefetch = 0 : i64, scratch_operands = 1 : i64, tpu.core_type = #tpu.core_type<tc>, window_params = [{transform_indices = @transform_0, window_bounds = array<i64: 8, 256>}, {pipeline_mode = #tpu.pipeline_mode<synchronous>, transform_indices = @transform_1, window_bounds = array<i64: 256, 128>}, {pipeline_mode = #tpu.pipeline_mode<synchronous>, transform_indices = @transform_2, window_bounds = array<i64: 1, 128>}, {transform_indices = @transform_3, window_bounds = array<i64: 1, 1, 128>}]} {
    %c0 = arith.constant 0 : index
    %c0_0 = arith.constant 0 : index
    %0 = vector.load %arg1[%c0, %c0_0] : memref<8x256xf32, #tpu.memory_space<vmem>>, vector<8x256xf32>
    %c0_1 = arith.constant 0 : index
    %c0_2 = arith.constant 0 : index
    %1 = vector.load %arg2[%c0_1, %c0_2] : memref<256x128xf32, #tpu.memory_space<vmem>>, vector<256x128xf32>
    %cst = arith.constant dense<0.000000e+00> : vector<8x128xf32>
    %2 = tpu.matmul %0, %1, %cst {dimension_numbers = #tpu.dot_dimension_numbers<[1], [0], [0], [1], [0, 0, 1, 1], [], []>} : vector<8x256xf32>, vector<256x128xf32>, vector<8x128xf32> -> vector<8x128xf32>
    %c0_3 = arith.constant 0 : index
    %c0_4 = arith.constant 0 : index
    %3 = vector.load %arg5[%c0_3, %c0_4] : memref<8x128xf32, #tpu.memory_space<vmem>>, vector<8x128xf32>
    tpu.vector_store %arg5[%c0_3, %c0_4], %2 {strides = array<i32>} : memref<8x128xf32, #tpu.memory_space<vmem>>, vector<8x128xf32>,
    %c0_5 = arith.constant 0 : index
    %c0_6 = arith.constant 0 : index
    %4 = vector.load %arg5[%c0_5, %c0_6] : memref<8x128xf32, #tpu.memory_space<vmem>>, vector<8x128xf32>
    %c0_i32 = arith.constant 0 : i32
    %5 = tpu.dynamic_rotate %4 by %c0_i32 dim 1 {stride = 4 : si32, stride_dimension = 0 : si32} : vector<8x128xf32>, i32 -> vector<8x128xf32>
    %cst_7 = arith.constant dense<0.000000e+00> : vector<128xf32>
    %6 = vector.multi_reduction <add>, %5, %cst_7 [0] : vector<8x128xf32> to vector<128xf32>
    %7 = vector.shape_cast %6 : vector<128xf32> to vector<1x128xf32>
    %c0_8 = arith.constant 0 : index
    %c0_9 = arith.constant 0 : index
    %8 = vector.load %arg3[%c0_8, %c0_9] : memref<1x128xf32, #tpu.memory_space<vmem>>, vector<1x128xf32>
    %9 = arith.mulf %7, %8 : vector<1x128xf32>
    %c0_10 = arith.constant 0 : index
    %c0_11 = arith.constant 0 : index
    %c0_12 = arith.constant 0 : index
    %10 = vector.load %arg4[%c0_10, %c0_11, %c0_12] : memref<1x1x128xf32, #tpu.memory_space<vmem>>, vector<1x1x128xf32>
    %11 = vector.shape_cast %10 : vector<1x1x128xf32> to vector<1x128xf32>
    %12 = vector.shape_cast %9 : vector<1x128xf32> to vector<1x1x128xf32>
    tpu.vector_store %arg4[%c0_10, %c0_11, %c0_12], %12 {strides = array<i32>} : memref<1x1x128xf32, #tpu.memory_space<vmem>>, vector<1x1x128xf32>,
    return
  }
  func.func @transform_0(%arg0: i32) -> (i32, i32) {
    %c0_i32 = arith.constant 0 : i32
    %c0_i32_0 = arith.constant 0 : i32
    return %arg0, %c0_i32 : i32, i32
  }
  func.func @transform_1(%arg0: i32) -> (i32, i32) {
    %c0_i32 = arith.constant 0 : i32
    %c0_i32_0 = arith.constant 0 : i32
    %c0_i32_1 = arith.constant 0 : i32
    return %c0_i32, %c0_i32_0 : i32, i32
  }
  func.func @transform_2(%arg0: i32) -> (i32, i32) {
    %c0_i32 = arith.constant 0 : i32
    %c0_i32_0 = arith.constant 0 : i32
    %c0_i32_1 = arith.constant 0 : i32
    return %c0_i32, %c0_i32_0 : i32, i32
  }
  func.func @transform_3(%arg0: i32) -> (i32, i32, i32) {
    %c0_i32 = arith.constant 0 : i32
    %c0_i32_0 = arith.constant 0 : i32
    %c0_i32_1 = arith.constant 0 : i32
    return %arg0, %c0_i32, %c0_i32_0 : i32, i32, i32
  }
}

</mosaic_0001>

<llo_original>
// kernel: tpu_custom_call.1
$region0: #{tpu_custom_call.1}
  #allocation0 [shape = 'u32[]', space=smem, size = 0x4, offset = 0x4, fixed_abs, tag = 'smem constant byte address 0x4 - core index']
  #allocation1 [shape = 'u32[72,128]{1,0:T(1,128)}', space=vmem, size = 0x9000, scoped, tag = 'internal scratch']
  #allocation2 [shape = 'f32[8,128]{1,0:T(8,128)}', space=vmem, size = 0x1000, scoped, tag = 'scratch operand']
  %s0 = inlined_call_operand.hbm [shape: f32[16,256], index: 0, kind: input, shape index: {}]
  %s1 = inlined_call_operand.hbm [shape: f32[256,128], index: 1, kind: input, shape index: {}]
  %s2 = inlined_call_operand.vmem [shape: f32[1,128], index: 2, kind: input, shape index: {}]
  %s3 = inlined_call_operand.hbm [shape: f32[2,1,128], index: 3, kind: output, shape index: {}]
  %s4 = sld [smem:[#allocation0]]
  $region53: #{tpu_custom_call.1} parent=0
    _
  %s6 = ssub.s32 1, %s4
  %s7 = scalar_select 0, %s6, %s4
  $region1: #{tpu_custom_call.1} parent=0
    #allocation3 [shape = 'u8[16384]{0}', space=vmem, size = 0x4000, scoped, tag = 'input window, operand 0']
    #allocation4 [shape = 's32[2]{0}', space=sflag, size = 0x8, scoped, tag = 'scoped memory for tpu_custom_call.1']
    #allocation5 [shape = 's32[2]{0}', space=sflag, size = 0x8, scoped, tag = 'scoped memory for tpu_custom_call.1']
    #allocation6 [shape = 'u8[131072]{0}', space=vmem, size = 0x20000, scoped, tag = 'input window, operand 1, single buffered']
    #allocation7 [shape = 's32[1]{0}', space=sflag, size = 0x4, scoped, tag = 'scoped memory for tpu_custom_call.1']
    #allocation8 [shape = 'u8[1024]{0}', space=vmem, size = 0x400, scoped, tag = 'output window, operand 0']
    %8 = vsyncpa [#allocation4], 0
    %s9 = scalar_lea.sflag [#allocation4], 1
    %10 = vsyncpa %s9, 0
    %11 = vsyncpa [#allocation7], 0
    %12 = vsyncpa [#allocation5], 0
    %s13 = scalar_lea.sflag [#allocation5], 1
    %14 = vsyncpa %s13, 0
    loop: start=0, step=1, limit=4
    $region2: #{tpu_custom_call.1} parent=1 // loop_pre_header
      _
    $region3: #{tpu_custom_call.1} parent=1 // loop_header
      %s16 = sphi 0, %s20
      %p17 = scmp.ge.s32.totalorder %s16, 4
      %s26 = sphi 0, %s28
      %s29 = sphi 0, %s26
      %s30 = sphi 0, %s29
      %s46 = sphi 0, %s30
      %s50 = sphi 0, %s50
      %s52 = sphi 0, %s50
      %s53 = sphi 0, %s52
      %s67 = sphi 0, %s53
      %s71 = sphi 0, %s71
      %s73 = sphi 0, %s71
      %s74 = sphi 0, %s73
      %s88 = sphi 0, %s74
      %s94 = sphi 0, %s96
      %s97 = sphi 0, %s94
      %s98 = sphi 0, %s97
      %s114 = sphi 0, %s98
    $region4: #{tpu_custom_call.1} parent=1 // loop_header_branch
      %19 = sbr.rel (%p17) target = $region8
    $region5: #{tpu_custom_call.1} parent=1 // loop_body
      %s21 = ssub.s32 %s16, 1
      %s22 = ssub.s32 %s16, 2
      %s23 = sadd.s32 %s16, 1
      %s24 = ssub.s32 %s16, %s23
      %p25 = scmp.eq.s32.totalorder %s24, 0
      %s27 = sadd.s32 %s26, 1
      %s28 = scalar_select %p25, %s26, %s27
      %p31 = pneg %p25
      %p32 = scmp.eq.s32.totalorder %s16, 1
      %p33 = por %p31, %p32
      %p34 = scmp.ne.s32.totalorder %s26, %s29
      %p35 = scmp.eq.s32.totalorder %s16, 0
      %p36 = por %p34, %p35
      %p37 = scmp.ne.s32.totalorder %s26, %s29
      %p38 = scmp.eq.s32.totalorder %s21, 1
      %p39 = por %p37, %p38
      %p40 = scmp.ne.s32.totalorder %s29, %s30
      %p41 = scmp.eq.s32.totalorder %s21, 0
      %p42 = por %p40, %p41
      %p43 = scmp.ne.s32.totalorder %s29, %s30
      %p44 = scmp.eq.s32.totalorder %s22, 1
      %p45 = por %p43, %p44
      %p47 = scmp.ne.s32.totalorder %s30, %s46
      %p48 = scmp.eq.s32.totalorder %s22, 0
      %p49 = por %p47, %p48
      %s51 = sadd.s32 %s50, 1
      %p54 = scmp.eq.s32.totalorder %s16, 1
      %p55 = scmp.ne.s32.totalorder %s50, %s52
      %p56 = scmp.eq.s32.totalorder %s16, 0
      %p57 = por %p55, %p56
      %p58 = scmp.ne.s32.totalorder %s50, %s52
      %p59 = scmp.eq.s32.totalorder %s21, 1
      %p60 = por %p58, %p59
      %p61 = scmp.ne.s32.totalorder %s52, %s53
      %p62 = scmp.eq.s32.totalorder %s21, 0
      %p63 = por %p61, %p62
      %p64 = scmp.ne.s32.totalorder %s52, %s53
      %p65 = scmp.eq.s32.totalorder %s22, 1
      %p66 = por %p64, %p65
      %p68 = scmp.ne.s32.totalorder %s53, %s67
      %p69 = scmp.eq.s32.totalorder %s22, 0
      %p70 = por %p68, %p69
      %s72 = sadd.s32 %s71, 1
      %p75 = scmp.eq.s32.totalorder %s16, 1
      %p76 = scmp.ne.s32.totalorder %s71, %s73
      %p77 = scmp.eq.s32.totalorder %s16, 0
      %p78 = por %p76, %p77
      %p79 = scmp.ne.s32.totalorder %s71, %s73
      %p80 = scmp.eq.s32.totalorder %s21, 1
      %p81 = por %p79, %p80
      %p82 = scmp.ne.s32.totalorder %s73, %s74
      %p83 = scmp.eq.s32.totalorder %s21, 0
      %p84 = por %p82, %p83
      %p85 = scmp.ne.s32.totalorder %s73, %s74
      %p86 = scmp.eq.s32.totalorder %s22, 1
      %p87 = por %p85, %p86
      %p89 = scmp.ne.s32.totalorder %s74, %s88
      %p90 = scmp.eq.s32.totalorder %s22, 0
      %p91 = por %p89, %p90
      %s92 = ssub.s32 %s16, %s23
      %p93 = scmp.eq.s32.totalorder %s92, 0
      %s95 = sadd.s32 %s94, 1
      %s96 = scalar_select %p93, %s94, %s95
      %p99 = pneg %p93
      %p100 = scmp.eq.s32.totalorder %s16, 1
      %p101 = por %p99, %p100
      %p102 = scmp.ne.s32.totalorder %s94, %s97
      %p103 = scmp.eq.s32.totalorder %s16, 0
      %p104 = por %p102, %p103
      %p105 = scmp.ne.s32.totalorder %s94, %s97
      %p106 = scmp.eq.s32.totalorder %s21, 1
      %p107 = por %p105, %p106
      %p108 = scmp.ne.s32.totalorder %s97, %s98
      %p109 = scmp.eq.s32.totalorder %s21, 0
      %p110 = por %p108, %p109
      %p111 = scmp.ne.s32.totalorder %s97, %s98
      %p112 = scmp.eq.s32.totalorder %s22, 1
      %p113 = por %p111, %p112
      %p115 = scmp.ne.s32.totalorder %s98, %s114
      %p116 = scmp.eq.s32.totalorder %s22, 0
      %p117 = por %p115, %p116
      %p118 = scmp.le.s32.totalorder 1, %s16
      %p119 = scmp.lt.s32.totalorder %s16, 3
      %p120 = pnand %p118, %p119
      %p121 = pneg %p120
      // Predicated region
      $region9: #{tpu_custom_call.1} parent=5 // pred_check
        _
      $region10: #{tpu_custom_call.1} parent=5 // pred_check_branch
        %123 = sbr.rel (%p120) target = $region12
      $region11: #{tpu_custom_call.1} parent=5 // pred_region
        %s124 = ssub.s32 %s16, 1
        // Predicated region
        $region13: #{tpu_custom_call.1} parent=11 // pred_check
          %p125 = pneg %p63
        $region14: #{tpu_custom_call.1} parent=11 // pred_check_branch
          %127 = sbr.rel (%p125) target = $region16
        $region15: #{tpu_custom_call.1} parent=11 // pred_region
          %129 = vsyncadd [#allocation7], 0
          %s130 = sshll.u32 %s1, 4
          %s131 = int_to_ptr.hbm [resolvable:$true] %s130
          %s132 = sshll.u32 [#allocation6], 4
          %s133 = int_to_ptr.vmem [resolvable:$true] %s132
          %138 = dma.hbm_to_vmem [thread:$0]  %s131, 4096, %s133, [#allocation7], 128, 128, 8
        $region16: #{tpu_custom_call.1} parent=11 // pred_fallthru
          _
        // Predicated region
        $region17: #{tpu_custom_call.1} parent=11 // pred_check
          %p139 = pneg %p84
        $region18: #{tpu_custom_call.1} parent=11 // pred_check_branch
          %141 = sbr.rel (%p139) target = $region20
        $region19: #{tpu_custom_call.1} parent=11 // pred_region
          _
        $region20: #{tpu_custom_call.1} parent=11 // pred_fallthru
          _
      $region12: #{tpu_custom_call.1} parent=5 // pred_fallthru
        _
      %p142 = scmp.lt.s32.totalorder %s16, 2
      // Predicated region
      $region21: #{tpu_custom_call.1} parent=5 // pred_check
        %p143 = pneg %p142
      $region22: #{tpu_custom_call.1} parent=5 // pred_check_branch
        %145 = sbr.rel (%p143) target = $region24
      $region23: #{tpu_custom_call.1} parent=5 // pred_region
        // Predicated region
        $region25: #{tpu_custom_call.1} parent=23 // pred_check
          %p146 = pneg %p36
        $region26: #{tpu_custom_call.1} parent=23 // pred_check_branch
          %148 = sbr.rel (%p146) target = $region28
        $region27: #{tpu_custom_call.1} parent=23 // pred_region
          %s149 = sand.u32 %s26, 1
          %s150 = scalar_lea.sflag [#allocation4], %s149
          %s151 = sand.u32 %s26, 1
          %s152 = smul.addr %s151, 16
          %s153 = scalar_lea.vmem [#allocation3], %s152
          %155 = vsyncadd %s150, 0
          %s156 = smul.addr %s16, 2
          %s157 = smul.addr %s156, 8
          %s158 = scalar_lea.hbm %s0, %s157
          %s160 = sshll.u32 %s158, 4
          %s161 = int_to_ptr.hbm [resolvable:$true] %s160
          %s162 = sshll.u32 %s153, 4
          %s163 = int_to_ptr.vmem [resolvable:$true] %s162
          %165 = dma.hbm_to_vmem [thread:$0]  %s161, 256, %s163, %s150
        $region28: #{tpu_custom_call.1} parent=23 // pred_fallthru
          _
      $region24: #{tpu_custom_call.1} parent=5 // pred_fallthru
        _
      %p166 = scmp.le.s32.totalorder 1, %s16
      %p167 = scmp.lt.s32.totalorder %s16, 3
      %p168 = pnand %p166, %p167
      %p169 = pneg %p168
      // Predicated region
      $region29: #{tpu_custom_call.1} parent=5 // pred_check
        _
      $region30: #{tpu_custom_call.1} parent=5 // pred_check_branch
        %171 = sbr.rel (%p168) target = $region32
      $region31: #{tpu_custom_call.1} parent=5 // pred_region
        %s172 = ssub.s32 %s16, 1
        %s173 = sand.u32 %s29, 1
        %s174 = scalar_lea.sflag [#allocation4], %s173
        %s175 = sand.u32 %s29, 1
        %s176 = smul.addr %s175, 16
        %s177 = scalar_lea.vmem [#allocation3], %s176
        // Predicated region
        $region33: #{tpu_custom_call.1} parent=31 // pred_check
          %p178 = pneg %p42
        $region34: #{tpu_custom_call.1} parent=31 // pred_check_branch
          %180 = sbr.rel (%p178) target = $region36
        $region35: #{tpu_custom_call.1} parent=31 // pred_region
          %182 = dma.done %s174, 256
        $region36: #{tpu_custom_call.1} parent=31 // pred_fallthru
          _
        // Predicated region
        $region37: #{tpu_custom_call.1} parent=31 // pred_check
          %p183 = pneg %p63
        $region38: #{tpu_custom_call.1} parent=31 // pred_check_branch
          %185 = sbr.rel (%p183) target = $region40
        $region39: #{tpu_custom_call.1} parent=31 // pred_region
          %187 = dma.done [#allocation7], 4096
        $region40: #{tpu_custom_call.1} parent=31 // pred_fallthru
          _
        %s188 = sand.u32 %s29, 1
        %s189 = scalar_lea.sflag [#allocation4], %s188
        %s190 = sand.u32 %s29, 1
        %s191 = smul.addr %s190, 16
        %s192 = scalar_lea.vmem [#allocation3], %s191
        %p193 = pneg %p42
        %p194 = pneg %p39
        %p195 = pneg %p63
        %p196 = pneg %p60
        %p197 = pneg %p84
        %p198 = pneg %p81
        %p199 = pneg %p110
        %p200 = pneg %p107
        %s201 = sand.u32 %s97, 1
        %s202 = scalar_lea.sflag [#allocation5], %s201
        %s203 = sand.u32 %s97, 1
        %s204 = scalar_lea.vmem [#allocation8], %s203
        %v205 = vld [vmem:[%s177] sm:$0xff]
        %v206 = vld [vmem:[%s177 + $0x8] sm:$0xff]
        %v207 = vld [vmem:[#allocation6] sm:$0xff]
        %v208 = vld [vmem:[#allocation6 + $0x8] sm:$0xff]
        %v209 = vld [vmem:[#allocation6 + $0x10] sm:$0xff]
        %v210 = vld [vmem:[#allocation6 + $0x18] sm:$0xff]
        %v211 = vld [vmem:[#allocation6 + $0x20] sm:$0xff]
        %v212 = vld [vmem:[#allocation6 + $0x28] sm:$0xff]
        %v213 = vld [vmem:[#allocation6 + $0x30] sm:$0xff]
        %v214 = vld [vmem:[#allocation6 + $0x38] sm:$0xff]
        %v215 = vld [vmem:[#allocation6 + $0x40] sm:$0xff]
        %v216 = vld [vmem:[#allocation6 + $0x48] sm:$0xff]
        %v217 = vld [vmem:[#allocation6 + $0x50] sm:$0xff]
        %v218 = vld [vmem:[#allocation6 + $0x58] sm:$0xff]
        %v219 = vld [vmem:[#allocation6 + $0x60] sm:$0xff]
        %v220 = vld [vmem:[#allocation6 + $0x68] sm:$0xff]
        %v221 = vld [vmem:[#allocation6 + $0x70] sm:$0xff]
        %v222 = vld [vmem:[#allocation6 + $0x78] sm:$0xff]
        %v223 = vld [vmem:[#allocation6 + $0x80] sm:$0xff]
        %v224 = vld [vmem:[#allocation6 + $0x88] sm:$0xff]
        %v225 = vld [vmem:[#allocation6 + $0x90] sm:$0xff]
        %v226 = vld [vmem:[#allocation6 + $0x98] sm:$0xff]
        %v227 = vld [vmem:[#allocation6 + $0xa0] sm:$0xff]
        %v228 = vld [vmem:[#allocation6 + $0xa8] sm:$0xff]
        %v229 = vld [vmem:[#allocation6 + $0xb0] sm:$0xff]
        %v230 = vld [vmem:[#allocation6 + $0xb8] sm:$0xff]
        %v231 = vld [vmem:[#allocation6 + $0xc0] sm:$0xff]
        %v232 = vld [vmem:[#allocation6 + $0xc8] sm:$0xff]
        %v233 = vld [vmem:[#allocation6 + $0xd0] sm:$0xff]
        %v234 = vld [vmem:[#allocation6 + $0xd8] sm:$0xff]
        %v235 = vld [vmem:[#allocation6 + $0xe0] sm:$0xff]
        %v236 = vld [vmem:[#allocation6 + $0xe8] sm:$0xff]
        %v237 = vld [vmem:[#allocation6 + $0xf0] sm:$0xff]
        %v238 = vld [vmem:[#allocation6 + $0xf8] sm:$0xff]
        %239 = vmatpush.msra.mxu0 %v222
        %240 = vmatpush.msra.mxu0 %v221
        %241 = vmatpush.msra.mxu0 %v220
        %242 = vmatpush.msra.mxu0 %v219
        %243 = vmatpush.msra.mxu0 %v218
        %244 = vmatpush.msra.mxu0 %v217
        %245 = vmatpush.msra.mxu0 %v216
        %246 = vmatpush.msra.mxu0 %v215
        %247 = vmatpush.msra.mxu0 %v214
        %248 = vmatpush.msra.mxu0 %v213
        %249 = vmatpush.msra.mxu0 %v212
        %250 = vmatpush.msra.mxu0 %v211
        %251 = vmatpush.msra.mxu0 %v210
        %252 = vmatpush.msra.mxu0 %v209
        %253 = vmatpush.msra.mxu0 %v208
        %254 = vmatpush.msra.mxu0 %v207
        %255 = vmatmul.f32.gmra.mxu0 %v205
        %v256 = vpop.f32.mrf.mxu0
        %v257 = vadd.f32 0.0, %v256
        %258 = vdwg.mxu0
        %259 = vmatpush.msra.mxu0 %v238
        %260 = vmatpush.msra.mxu0 %v237
        %261 = vmatpush.msra.mxu0 %v236
        %262 = vmatpush.msra.mxu0 %v235
        %263 = vmatpush.msra.mxu0 %v234
        %264 = vmatpush.msra.mxu0 %v233
        %265 = vmatpush.msra.mxu0 %v232
        %266 = vmatpush.msra.mxu0 %v231
        %267 = vmatpush.msra.mxu0 %v230
        %268 = vmatpush.msra.mxu0 %v229
        %269 = vmatpush.msra.mxu0 %v228
        %270 = vmatpush.msra.mxu0 %v227
        %271 = vmatpush.msra.mxu0 %v226
        %272 = vmatpush.msra.mxu0 %v225
        %273 = vmatpush.msra.mxu0 %v224
        %274 = vmatpush.msra.mxu0 %v223
        %275 = vmatmul.f32.gmra.mxu0 %v206
        %v276 = vpop.f32.mrf.mxu0
        %v277 = vadd.f32 %v257, %v276
        %278 = vdwg.mxu0
        %279 = vst [vmem:[#allocation2] sm:$0xff] %v277
        %v280 = vld [vmem:[#allocation2] sm:$0xff]
        %282 = vrot.lane.b32.xlu0 %v280, 1024
        %v283 = vpop.permute.xlu0 %282
        %v284 = vrot.slane %v283, 4
        %v285 = vadd.f32 %v283, %v284
        %v286 = vrot.slane %v285, 2
        %v287 = vadd.f32 %v285, %v286
        %v288 = vrot.slane %v287, 1
        %v289 = vadd.f32 %v287, %v288
        %v290 = vld [vmem:[%s2] sm:$0x1]
        %v291 = vmul.f32 %v289, %v290
        %292 = vst [vmem:[%s204] sm:$0x1] %v291
        %s293 = sand.u32 %s97, 1
        %s294 = scalar_lea.sflag [#allocation5], %s293
        %s295 = sand.u32 %s97, 1
        %s296 = scalar_lea.vmem [#allocation8], %s295
        // Predicated region
        $region41: #{tpu_custom_call.1} parent=31 // pred_check
          %p297 = pneg %p107
        $region42: #{tpu_custom_call.1} parent=31 // pred_check_branch
          %299 = sbr.rel (%p297) target = $region44
        $region43: #{tpu_custom_call.1} parent=31 // pred_region
          %301 = vsyncadd %s294, 0
          %s302 = scalar_lea.hbm %s3, %s21
          %s304 = sshll.u32 %s296, 4
          %s305 = int_to_ptr.vmem [resolvable:$true] %s304
          %s306 = sshll.u32 %s302, 4
          %s307 = int_to_ptr.hbm [resolvable:$true] %s306
          %309 = dma.vmem_to_hbm [thread:$0]  %s305, 16, %s307, %s294
        $region44: #{tpu_custom_call.1} parent=31 // pred_fallthru
          _
      $region32: #{tpu_custom_call.1} parent=5 // pred_fallthru
        _
      %p310 = scmp.le.s32.totalorder 2, %s16
      // Predicated region
      $region45: #{tpu_custom_call.1} parent=5 // pred_check
        %p311 = pneg %p310
      $region46: #{tpu_custom_call.1} parent=5 // pred_check_branch
        %313 = sbr.rel (%p311) target = $region48
      $region47: #{tpu_custom_call.1} parent=5 // pred_region
        %s314 = ssub.s32 %s16, 2
        // Predicated region
        $region49: #{tpu_custom_call.1} parent=47 // pred_check
          %p315 = pneg %p113
        $region50: #{tpu_custom_call.1} parent=47 // pred_check_branch
          %317 = sbr.rel (%p315) target = $region52
        $region51: #{tpu_custom_call.1} parent=47 // pred_region
          %s318 = sand.u32 %s98, 1
          %s319 = scalar_lea.sflag [#allocation5], %s318
          %s320 = sand.u32 %s98, 1
          %s321 = scalar_lea.vmem [#allocation8], %s320
          %323 = dma.done %s319, 16
        $region52: #{tpu_custom_call.1} parent=47 // pred_fallthru
          _
      $region48: #{tpu_custom_call.1} parent=5 // pred_fallthru
        _
    $region6: #{tpu_custom_call.1} parent=1 // loop_footer
      %s20 = sadd.s32 1, %s16
    $region7: #{tpu_custom_call.1} parent=1 // loop_footer_branch
      %15 = sbr.rel target = $region3
    $region8: #{tpu_custom_call.1} parent=1 // loop_exit
      _
    %324 = vsyncpa [#allocation4], 1
    %s325 = scalar_lea.sflag [#allocation4], 1
    %326 = vsyncpa %s325, 1
    %327 = vsyncpa [#allocation7], 1
    %328 = vsyncpa [#allocation5], 1
    %s329 = scalar_lea.sflag [#allocation5], 1
    %330 = vsyncpa %s329, 1

</llo_original>
